<compile_context>
chip_gen: v7x
topology: tpu7x:2x2x1
jax: 0.10.0
libtpu: 0.0.40
codegen_flags: <defaults>
</compile_context>

<pallas_src>
import math

import jax
import jax.numpy as jnp
from jax.experimental import pallas as pl
from jax.experimental.pallas import tpu as pltpu


def _round_up(x, m):
    return ((x + m - 1) // m) * m


def _cdiv(a, b):
    return (a + b - 1) // b


# ---------------------------------------------------------------------------
# Kernels
# ---------------------------------------------------------------------------

def _predict_kernel(x_ref, w_ref, b_ref, p_ref, idx_ref):
    # logits: (TM, L) f32, computed on the MXU.
    logits = jnp.dot(x_ref[...], w_ref[...], preferred_element_type=jnp.float32)
    logits = logits + b_ref[...]

    # Softmax over the lane (label) axis. Divide goes through the EUP reciprocal plus
    # one Newton step (cheap VALU) to keep near-exact f32 accuracy.
    m = jnp.max(logits, axis=-1, keepdims=True)            # (TM, 1)
    e = jnp.exp(logits - m)
    denom = jnp.sum(e, axis=-1, keepdims=True)             # (TM, 1)
    inv = pl.reciprocal(denom, approx=True)
    inv = inv * (2.0 - denom * inv)                        # Newton refinement
    p_ref[...] = (e * inv).astype(p_ref.dtype)

    # Argmax (first occurrence on ties) along the lane axis, reusing the row max `m`.
    # No transpose: the (TM, 1) int32 result is tiny next to the p writes.
    lane = jax.lax.broadcasted_iota(jnp.int32, logits.shape, 1)
    big = jnp.int32(logits.shape[-1])
    idx = jnp.min(jnp.where(logits == m, lane, big), axis=-1, keepdims=True)
    idx_ref[...] = idx.astype(idx_ref.dtype)


def _loss_kernel(x_ref, w_ref, b_ref, lab_ref, mask_ref, loss_ref):
    # Masked NLL in log-sum-exp form: never materializes probabilities, no divide, no
    # log of a possibly-underflowed p; masked / padded rows are zeroed via jnp.where.
    logits = jnp.dot(x_ref[...], w_ref[...], preferred_element_type=jnp.float32)
    logits = logits + b_ref[...]                           # (TM, L)
    m = jnp.max(logits, axis=-1, keepdims=True)            # (TM, 1)
    lse = m + jnp.log(jnp.sum(jnp.exp(logits - m), axis=-1, keepdims=True))

    # Fused one-hot pick: no (TM, L) one-hot intermediate, one VALU pass total.
    lane = jax.lax.broadcasted_iota(jnp.int32, logits.shape, 1)
    picked = jnp.sum(jnp.where(lane == lab_ref[...], logits, 0.0),
                     axis=-1, keepdims=True)               # (TM, 1)

    losses = jnp.where(mask_ref[...] > 0.0, lse - picked, 0.0)   # (TM, 1)
    tile_loss = jnp.sum(losses, axis=0, keepdims=True)            # (1, 1)
    loss_ref[...] = tile_loss.reshape(loss_ref.shape).astype(loss_ref.dtype)


# ---------------------------------------------------------------------------
# VMEM budget / tiling policy (generation-aware)
# ---------------------------------------------------------------------------

def _vmem_limit_bytes():
    # ~3/4 of physical VMEM: 96 MiB on v5e/v6e (128 MiB), 48 MiB on v7x (64 MiB),
    # leaving headroom for compiler scratch and pipeline buffers.
    try:
        cap = int(pltpu.get_tpu_info().vmem_capacity_bytes)
    except Exception:
        cap = 64 * 1024 * 1024
    return (cap * 3) // 4


def _pick_row_tile(n, d, l, vmem_limit):
    """Adaptive row tile: biggest tm (<=1024, multiple of 8) whose double-buffered
    blocks fit half the VMEM budget, with minimal row padding and grid >= 2 when
    there is enough work (keeps both v7x TensorCores busy)."""
    n8 = _round_up(max(int(n), 1), 8)
    fixed = 2 * 4 * (d * l + l)                      # resident weight + bias (2 bufs)
    budget = max(vmem_limit // 2 - fixed, 1 << 20)   # half the limit for tiles
    per_row = 4 * (2 * d + 2 * l + 16)               # x + p/logits blocks (x2 bufs) + small cols
    tm_cap = budget // per_row
    tm_cap = int(max(8, min(1024, (tm_cap // 8) * 8)))
    min_grid = 2 if n8 >= 16 else 1
    grid = max(min_grid, _cdiv(n8, tm_cap))
    tm = _round_up(_cdiv(n8, grid), 8)
    return tm, grid, tm * grid


# ---------------------------------------------------------------------------
# pallas_call wrappers
# ---------------------------------------------------------------------------

def _predict_call(x, w_t, b2, *, tm, grid, p_dtype, vmem_limit):
    n_pad, d = x.shape
    l = w_t.shape[1]
    return pl.pallas_call(
        _predict_kernel,
        out_shape=(
            jax.ShapeDtypeStruct((n_pad, l), p_dtype),
            jax.ShapeDtypeStruct((n_pad, 1), jnp.int32),
        ),
        grid_spec=pltpu.PrefetchScalarGridSpec(
            num_scalar_prefetch=0,
            grid=(grid,),
            in_specs=[
                pl.BlockSpec((tm, d), lambda i: (i, 0)),
                pl.BlockSpec((d, l), lambda i: (0, 0)),
                pl.BlockSpec((1, l), lambda i: (0, 0)),
            ],
            out_specs=[
                pl.BlockSpec((tm, l), lambda i: (i, 0)),
                pl.BlockSpec((tm, 1), lambda i: (i, 0)),
            ],
        ),
        compiler_params=pltpu.CompilerParams(
            dimension_semantics=("parallel",),
            vmem_limit_bytes=vmem_limit,
        ),
    )(x, w_t, b2)


def _loss_call(x, w_t, b2, labels, mask, *, tm, grid, vmem_limit):
    n_pad, d = x.shape
    l = w_t.shape[1]
    return pl.pallas_call(
        _loss_kernel,
        out_shape=jax.ShapeDtypeStruct((grid, 1, 1), jnp.float32),
        grid_spec=pltpu.PrefetchScalarGridSpec(
            num_scalar_prefetch=0,
            grid=(grid,),
            in_specs=[
                pl.BlockSpec((tm, d), lambda i: (i, 0)),
                pl.BlockSpec((d, l), lambda i: (0, 0)),
                pl.BlockSpec((1, l), lambda i: (0, 0)),
                pl.BlockSpec((tm, 1), lambda i: (i, 0)),
                pl.BlockSpec((tm, 1), lambda i: (i, 0)),
            ],
            out_specs=pl.BlockSpec((1, 1, 1), lambda i: (i, 0, 0)),
        ),
        compiler_params=pltpu.CompilerParams(
            dimension_semantics=("parallel",),  # per-tile partials -> megacore-friendly
            vmem_limit_bytes=vmem_limit,
        ),
    )(x, w_t, b2, labels, mask)


# ---------------------------------------------------------------------------
# Public forward
# ---------------------------------------------------------------------------

def softmax_decoder_forward(inputs, lens, weight, bias, label_ids=None, *,
                            p_dtype=jnp.float32):
    """Pallas equivalent of SoftmaxDecoder.forward.

    inputs: (B, S, D) float32
    lens:   (B,) int32
    weight: (L, D) float32   (PyTorch nn.Linear weight layout)
    bias:   (L,)  float32
    label_ids: optional (B, S) int32
    p_dtype: dtype of the returned probabilities (pass jnp.bfloat16 to halve the
             dominant HBM write when downstream tolerates it).
    """
    b_sz, s_len, d = inputs.shape
    l = weight.shape[0]
    n = b_sz * s_len

    vmem_limit = _vmem_limit_bytes()
    tm, grid, n_pad = _pick_row_tile(n, d, l, vmem_limit)

    x = inputs.reshape(n, d).astype(jnp.float32)
    if n_pad != n:
        x = jnp.pad(x, ((0, n_pad - n), (0, 0)))   # at most a few rows with adaptive tm

    w_t = weight.T.astype(jnp.float32)              # (D, L): logits = x @ w_t + b
    b2 = bias.astype(jnp.float32).reshape(1, l)

    if label_ids is None:
        p_flat, idx_flat = _predict_call(x, w_t, b2, tm=tm, grid=grid,
                                         p_dtype=p_dtype, vmem_limit=vmem_limit)
        if n_pad != n:
            p_flat = p_flat[:n]
            idx_flat = idx_flat[:n]
        p = p_flat.reshape(b_sz, s_len, l)
        # TODO(synk): torch.argmax returns int64; int32 used here (TPU-native).
        idx = idx_flat.reshape(b_sz * s_len if n_pad == n else n)[:n].reshape(b_sz, s_len)
        return idx, p
    else:
        predict_mask = jnp.arange(s_len)[None, :] < lens[:, None]   # (B, S) bool
        labels = label_ids.reshape(n).astype(jnp.int32)
        mask = predict_mask.reshape(n).astype(jnp.float32)
        if n_pad != n:
            labels = jnp.pad(labels, (0, n_pad - n))
            mask = jnp.pad(mask, (0, n_pad - n))
        labels = labels.reshape(n_pad, 1)
        mask = mask.reshape(n_pad, 1)
        partials = _loss_call(x, w_t, b2, labels, mask, tm=tm, grid=grid,
                              vmem_limit=vmem_limit)
        return jnp.sum(partials)


# ---------------------------------------------------------------------------
# Pure-JAX reference & self-test
# ---------------------------------------------------------------------------

def _reference_forward(inputs, lens, weight, bias, label_ids=None):
    """Pure-JAX reference matching the PyTorch module."""
    b_sz, s_len, d = inputs.shape
    logits = jnp.einsum("bsd,ld->bsl", inputs, weight) + bias
    p = jax.nn.softmax(logits, axis=-1)
    predict_mask = jnp.arange(s_len)[None, :] < lens[:, None]
    if label_ids is None:
        return jnp.argmax(logits, axis=-1), p
    one_hot = jax.nn.one_hot(label_ids, weight.shape[0], dtype=p.dtype)
    losses = -jnp.log(jnp.sum(one_hot * p, axis=-1))
    return jnp.sum(jnp.where(predict_mask, losses, 0.0))


if __name__ == "__main__":
    # Small shapes implied by forward(): batch=2, seq=8, input_dim=32, label_size=8.
    B, S, D, L = 2, 8, 32, 8

    key = jax.random.PRNGKey(0)
    k_x, k_w, k_b, k_lab = jax.random.split(key, 4)

    inputs = jax.random.normal(k_x, (B, S, D), dtype=jnp.float32)
    lens = jnp.array([8, 5], dtype=jnp.int32)
    label_ids = jax.random.randint(k_lab, (B, S), 0, L, dtype=jnp.int32)

    # Deterministic parameter init mirroring SoftmaxDecoder.init_weights.
    w_bound = math.sqrt(6.0 / (L + D))
    weight = jax.random.uniform(k_w, (L, D), minval=-w_bound, maxval=w_bound,
                                dtype=jnp.float32)
    b_bound = 1.0 / math.sqrt(D)
    bias = jax.random.uniform(k_b, (L,), minval=-b_bound, maxval=b_bound,
                              dtype=jnp.float32)

    # Inference path: (argmax, p)
    pred_idx, p = softmax_decoder_forward(inputs, lens, weight, bias, None)
    jax.block_until_ready((pred_idx, p))

    # Training path: masked NLL loss (scalar)
    loss = softmax_decoder_forward(inputs, lens, weight, bias, label_ids)
    jax.block_until_ready(loss)

    # Check against pure-JAX reference.
    ref_idx, ref_p = _reference_forward(inputs, lens, weight, bias, None)
    ref_loss = _reference_forward(inputs, lens, weight, bias, label_ids)

    assert jnp.all(pred_idx == ref_idx.astype(jnp.int32)), "argmax mismatch"
    assert jnp.allclose(p, ref_p, atol=5e-4, rtol=5e-4), "softmax mismatch"
    assert jnp.allclose(loss, ref_loss, atol=1e-4, rtol=1e-4), "loss mismatch"

    print("KERNEL_OK")
</pallas_src>

<mosaic_0001>
module attributes {stable_mosaic.version = 11 : i64} {
  func.func @_predict_kernel(%arg0: i32, %arg1: memref<8x32xf32, #tpu.memory_space<vmem>>, %arg2: memref<32x8xf32, #tpu.memory_space<vmem>>, %arg3: memref<1x8xf32, #tpu.memory_space<vmem>>, %arg4: memref<8x8xf32, #tpu.memory_space<vmem>>, %arg5: memref<8x1xi32, #tpu.memory_space<vmem>>) attributes {dimension_semantics = [#tpu.dimension_semantics<parallel>], iteration_bounds = array<i64: 2>, scalar_prefetch = 0 : i64, scratch_operands = 0 : i64, tpu.core_type = #tpu.core_type<tc>, window_params = [{transform_indices = @transform_0, window_bounds = array<i64: 8, 32>}, {pipeline_mode = #tpu.pipeline_mode<synchronous>, transform_indices = @transform_1, window_bounds = array<i64: 32, 8>}, {pipeline_mode = #tpu.pipeline_mode<synchronous>, transform_indices = @transform_2, window_bounds = array<i64: 1, 8>}, {transform_indices = @transform_3, window_bounds = array<i64: 8, 8>}, {transform_indices = @transform_4, window_bounds = array<i64: 8, 1>}]} {
    %c0 = arith.constant 0 : index
    %c0_0 = arith.constant 0 : index
    %0 = vector.load %arg1[%c0, %c0_0] : memref<8x32xf32, #tpu.memory_space<vmem>>, vector<8x32xf32>
    %c0_1 = arith.constant 0 : index
    %c0_2 = arith.constant 0 : index
    %1 = vector.load %arg2[%c0_1, %c0_2] : memref<32x8xf32, #tpu.memory_space<vmem>>, vector<32x8xf32>
    %cst = arith.constant dense<0.000000e+00> : vector<8x8xf32>
    %2 = tpu.matmul %0, %1, %cst {dimension_numbers = #tpu.dot_dimension_numbers<[1], [0], [0], [1], [0, 0, 1, 1], [], []>} : vector<8x32xf32>, vector<32x8xf32>, vector<8x8xf32> -> vector<8x8xf32>
    %c0_3 = arith.constant 0 : index
    %c0_4 = arith.constant 0 : index
    %3 = vector.load %arg3[%c0_3, %c0_4] : memref<1x8xf32, #tpu.memory_space<vmem>>, vector<1x8xf32>
    %4 = vector.broadcast %3 : vector<1x8xf32> to vector<8x8xf32>
    %5 = arith.addf %2, %4 : vector<8x8xf32>
    %cst_5 = arith.constant dense<0xFF800000> : vector<8xf32>
    %6 = vector.multi_reduction <maximumf>, %5, %cst_5 [1] : vector<8x8xf32> to vector<8xf32>
    %7 = vector.shape_cast %6 : vector<8xf32> to vector<8x1xf32>
    %8 = vector.broadcast %7 : vector<8x1xf32> to vector<8x8xf32>
    %9 = arith.subf %5, %8 : vector<8x8xf32>
    %10 = math.exp %9 : vector<8x8xf32>
    %cst_6 = arith.constant dense<0.000000e+00> : vector<8xf32>
    %11 = vector.multi_reduction <add>, %10, %cst_6 [1] : vector<8x8xf32> to vector<8xf32>
    %12 = vector.shape_cast %11 : vector<8xf32> to vector<8x1xf32>
    %13 = tpu.reciprocal %12 {approx = true} : vector<8x1xf32> -> vector<8x1xf32>
    %14 = arith.mulf %12, %13 : vector<8x1xf32>
    %cst_7 = arith.constant 2.000000e+00 : f32
    %15 = vector.broadcast %cst_7 : f32 to vector<8x1xf32>
    %16 = arith.subf %15, %14 : vector<8x1xf32>
    %17 = arith.mulf %13, %16 : vector<8x1xf32>
    %18 = vector.broadcast %17 : vector<8x1xf32> to vector<8x8xf32>
    %19 = arith.mulf %10, %18 : vector<8x8xf32>
    %c0_8 = arith.constant 0 : index
    %c0_9 = arith.constant 0 : index
    %20 = vector.load %arg4[%c0_8, %c0_9] : memref<8x8xf32, #tpu.memory_space<vmem>>, vector<8x8xf32>
    tpu.vector_store %arg4[%c0_8, %c0_9], %19 {strides = array<i32>} : memref<8x8xf32, #tpu.memory_space<vmem>>, vector<8x8xf32>,
    %21 = tpu.iota {dimensions = array<i32: 1>} : vector<8x8xi32>
    %22 = vector.broadcast %7 : vector<8x1xf32> to vector<8x8xf32>
    %23 = arith.cmpf oeq, %5, %22 : vector<8x8xf32>
    %c8_i32 = arith.constant 8 : i32
    %24 = vector.broadcast %c8_i32 : i32 to vector<8x8xi32>
    %25 = arith.select %23, %21, %24 : vector<8x8xi1>, vector<8x8xi32>
    %cst_10 = arith.constant dense<2147483647> : vector<8xi32>
    %26 = vector.multi_reduction <minsi>, %25, %cst_10 [1] : vector<8x8xi32> to vector<8xi32>
    %27 = vector.shape_cast %26 : vector<8xi32> to vector<8x1xi32>
    %c0_11 = arith.constant 0 : index
    %c0_12 = arith.constant 0 : index
    %28 = vector.load %arg5[%c0_11, %c0_12] : memref<8x1xi32, #tpu.memory_space<vmem>>, vector<8x1xi32>
    tpu.vector_store %arg5[%c0_11, %c0_12], %27 {strides = array<i32>} : memref<8x1xi32, #tpu.memory_space<vmem>>, vector<8x1xi32>,
    return
  }
  func.func @transform_0(%arg0: i32) -> (i32, i32) {
    %c0_i32 = arith.constant 0 : i32
    %c0_i32_0 = arith.constant 0 : i32
    return %arg0, %c0_i32 : i32, i32
  }
  func.func @transform_1(%arg0: i32) -> (i32, i32) {
    %c0_i32 = arith.constant 0 : i32
    %c0_i32_0 = arith.constant 0 : i32
    %c0_i32_1 = arith.constant 0 : i32
    return %c0_i32, %c0_i32_0 : i32, i32
  }
  func.func @transform_2(%arg0: i32) -> (i32, i32) {
    %c0_i32 = arith.constant 0 : i32
    %c0_i32_0 = arith.constant 0 : i32
    %c0_i32_1 = arith.constant 0 : i32
    return %c0_i32, %c0_i32_0 : i32, i32
  }
  func.func @transform_3(%arg0: i32) -> (i32, i32) {
    %c0_i32 = arith.constant 0 : i32
    %c0_i32_0 = arith.constant 0 : i32
    return %arg0, %c0_i32 : i32, i32
  }
  func.func @transform_4(%arg0: i32) -> (i32, i32) {
    %c0_i32 = arith.constant 0 : i32
    %c0_i32_0 = arith.constant 0 : i32
    return %arg0, %c0_i32 : i32, i32
  }
}

</mosaic_0001>

<llo_original>
// kernel: tpu_custom_call.1
$region0: #{tpu_custom_call.1}
  #allocation0 [shape = 'u32[]', space=smem, size = 0x4, offset = 0x4, fixed_abs, tag = 'smem constant byte address 0x4 - core index']
  #allocation1 [shape = 'u32[144,128]{1,0:T(1,128)}', space=vmem, size = 0x12000, scoped, tag = 'internal scratch']
  %s0 = inlined_call_operand.vmem [shape: f32[16,32], index: 0, kind: input, shape index: {}]
  %s1 = inlined_call_operand.vmem [shape: f32[32,8], index: 1, kind: input, shape index: {}]
  %s2 = inlined_call_operand.vmem [shape: f32[1,8], index: 2, kind: input, shape index: {}]
  %s3 = inlined_call_operand.vmem [shape: f32[16,8], index: 3, kind: output, shape index: {0}]
  %s4 = inlined_call_operand.vmem [shape: s32[16,1], index: 4, kind: output, shape index: {1}]
  %5 = xla_tuple %s3, %s4
  %s6 = sld [smem:[#allocation0]]
  $region53: #{tpu_custom_call.1} parent=0
    _
  %s8 = ssub.s32 1, %s6
  %s9 = scalar_select 0, %s8, %s6
  loop: start=0, step=1, limit=4
  $region2: #{tpu_custom_call.1} parent=0 // loop_pre_header
    _
  $region3: #{tpu_custom_call.1} parent=0 // loop_header
    %s11 = sphi 0, %s15
    %p12 = scmp.ge.s32.totalorder %s11, 4
    %s21 = sphi 0, %s23
    %s24 = sphi 0, %s21
    %s25 = sphi 0, %s24
    %s41 = sphi 0, %s25
    %s45 = sphi 0, %s45
    %s47 = sphi 0, %s45
    %s48 = sphi 0, %s47
    %s62 = sphi 0, %s48
    %s66 = sphi 0, %s66
    %s68 = sphi 0, %s66
    %s69 = sphi 0, %s68
    %s83 = sphi 0, %s69
    %s89 = sphi 0, %s91
    %s92 = sphi 0, %s89
    %s93 = sphi 0, %s92
    %s109 = sphi 0, %s93
    %s115 = sphi 0, %s117
    %s118 = sphi 0, %s115
    %s119 = sphi 0, %s118
    %s135 = sphi 0, %s119
  $region4: #{tpu_custom_call.1} parent=0 // loop_header_branch
    %14 = sbr.rel (%p12) target = $region8
  $region5: #{tpu_custom_call.1} parent=0 // loop_body
    %s16 = ssub.s32 %s11, 1
    %s17 = ssub.s32 %s11, 2
    %s18 = sadd.s32 %s11, 1
    %s19 = ssub.s32 %s11, %s18
    %p20 = scmp.eq.s32.totalorder %s19, 0
    %s22 = sadd.s32 %s21, 1
    %s23 = scalar_select %p20, %s21, %s22
    %p26 = pneg %p20
    %p27 = scmp.eq.s32.totalorder %s11, 1
    %p28 = por %p26, %p27
    %p29 = scmp.ne.s32.totalorder %s21, %s24
    %p30 = scmp.eq.s32.totalorder %s11, 0
    %p31 = por %p29, %p30
    %p32 = scmp.ne.s32.totalorder %s21, %s24
    %p33 = scmp.eq.s32.totalorder %s16, 1
    %p34 = por %p32, %p33
    %p35 = scmp.ne.s32.totalorder %s24, %s25
    %p36 = scmp.eq.s32.totalorder %s16, 0
    %p37 = por %p35, %p36
    %p38 = scmp.ne.s32.totalorder %s24, %s25
    %p39 = scmp.eq.s32.totalorder %s17, 1
    %p40 = por %p38, %p39
    %p42 = scmp.ne.s32.totalorder %s25, %s41
    %p43 = scmp.eq.s32.totalorder %s17, 0
    %p44 = por %p42, %p43
    %s46 = sadd.s32 %s45, 1
    %p49 = scmp.eq.s32.totalorder %s11, 1
    %p50 = scmp.ne.s32.totalorder %s45, %s47
    %p51 = scmp.eq.s32.totalorder %s11, 0
    %p52 = por %p50, %p51
    %p53 = scmp.ne.s32.totalorder %s45, %s47
    %p54 = scmp.eq.s32.totalorder %s16, 1
    %p55 = por %p53, %p54
    %p56 = scmp.ne.s32.totalorder %s47, %s48
    %p57 = scmp.eq.s32.totalorder %s16, 0
    %p58 = por %p56, %p57
    %p59 = scmp.ne.s32.totalorder %s47, %s48
    %p60 = scmp.eq.s32.totalorder %s17, 1
    %p61 = por %p59, %p60
    %p63 = scmp.ne.s32.totalorder %s48, %s62
    %p64 = scmp.eq.s32.totalorder %s17, 0
    %p65 = por %p63, %p64
    %s67 = sadd.s32 %s66, 1
    %p70 = scmp.eq.s32.totalorder %s11, 1
    %p71 = scmp.ne.s32.totalorder %s66, %s68
    %p72 = scmp.eq.s32.totalorder %s11, 0
    %p73 = por %p71, %p72
    %p74 = scmp.ne.s32.totalorder %s66, %s68
    %p75 = scmp.eq.s32.totalorder %s16, 1
    %p76 = por %p74, %p75
    %p77 = scmp.ne.s32.totalorder %s68, %s69
    %p78 = scmp.eq.s32.totalorder %s16, 0
    %p79 = por %p77, %p78
    %p80 = scmp.ne.s32.totalorder %s68, %s69
    %p81 = scmp.eq.s32.totalorder %s17, 1
    %p82 = por %p80, %p81
    %p84 = scmp.ne.s32.totalorder %s69, %s83
    %p85 = scmp.eq.s32.totalorder %s17, 0
    %p86 = por %p84, %p85
    %s87 = ssub.s32 %s11, %s18
    %p88 = scmp.eq.s32.totalorder %s87, 0
    %s90 = sadd.s32 %s89, 1
    %s91 = scalar_select %p88, %s89, %s90
    %p94 = pneg %p88
    %p95 = scmp.eq.s32.totalorder %s11, 1
    %p96 = por %p94, %p95
    %p97 = scmp.ne.s32.totalorder %s89, %s92
    %p98 = scmp.eq.s32.totalorder %s11, 0
    %p99 = por %p97, %p98
    %p100 = scmp.ne.s32.totalorder %s89, %s92
    %p101 = scmp.eq.s32.totalorder %s16, 1
    %p102 = por %p100, %p101
    %p103 = scmp.ne.s32.totalorder %s92, %s93
    %p104 = scmp.eq.s32.totalorder %s16, 0
    %p105 = por %p103, %p104
    %p106 = scmp.ne.s32.totalorder %s92, %s93
    %p107 = scmp.eq.s32.totalorder %s17, 1
    %p108 = por %p106, %p107
    %p110 = scmp.ne.s32.totalorder %s93, %s109
    %p111 = scmp.eq.s32.totalorder %s17, 0
    %p112 = por %p110, %p111
    %s113 = ssub.s32 %s11, %s18
    %p114 = scmp.eq.s32.totalorder %s113, 0
    %s116 = sadd.s32 %s115, 1
    %s117 = scalar_select %p114, %s115, %s116
    %p120 = pneg %p114
    %p121 = scmp.eq.s32.totalorder %s11, 1
    %p122 = por %p120, %p121
    %p123 = scmp.ne.s32.totalorder %s115, %s118
    %p124 = scmp.eq.s32.totalorder %s11, 0
    %p125 = por %p123, %p124
    %p126 = scmp.ne.s32.totalorder %s115, %s118
    %p127 = scmp.eq.s32.totalorder %s16, 1
    %p128 = por %p126, %p127
    %p129 = scmp.ne.s32.totalorder %s118, %s119
    %p130 = scmp.eq.s32.totalorder %s16, 0
    %p131 = por %p129, %p130
    %p132 = scmp.ne.s32.totalorder %s118, %s119
    %p133 = scmp.eq.s32.totalorder %s17, 1
    %p134 = por %p132, %p133
    %p136 = scmp.ne.s32.totalorder %s119, %s135
    %p137 = scmp.eq.s32.totalorder %s17, 0
    %p138 = por %p136, %p137
    %p139 = scmp.le.s32.totalorder 1, %s11
    %p140 = scmp.lt.s32.totalorder %s11, 3
    %p141 = pnand %p139, %p140
    %p142 = pneg %p141
    // Predicated region
    $region9: #{tpu_custom_call.1} parent=5 // pred_check
      _
    $region10: #{tpu_custom_call.1} parent=5 // pred_check_branch
      %144 = sbr.rel (%p141) target = $region12
    $region11: #{tpu_custom_call.1} parent=5 // pred_region
      %s145 = ssub.s32 %s11, 1
      // Predicated region
      $region13: #{tpu_custom_call.1} parent=11 // pred_check
        %p146 = pneg %p58
      $region14: #{tpu_custom_call.1} parent=11 // pred_check_branch
        %148 = sbr.rel (%p146) target = $region16
      $region15: #{tpu_custom_call.1} parent=11 // pred_region
        _
      $region16: #{tpu_custom_call.1} parent=11 // pred_fallthru
        _
      // Predicated region
      $region17: #{tpu_custom_call.1} parent=11 // pred_check
        %p149 = pneg %p79
      $region18: #{tpu_custom_call.1} parent=11 // pred_check_branch
        %151 = sbr.rel (%p149) target = $region20
      $region19: #{tpu_custom_call.1} parent=11 // pred_region
        _
      $region20: #{tpu_custom_call.1} parent=11 // pred_fallthru
        _
    $region12: #{tpu_custom_call.1} parent=5 // pred_fallthru
      _
    %p152 = scmp.lt.s32.totalorder %s11, 2
    // Predicated region
    $region21: #{tpu_custom_call.1} parent=5 // pred_check
      %p153 = pneg %p152
    $region22: #{tpu_custom_call.1} parent=5 // pred_check_branch
      %155 = sbr.rel (%p153) target = $region24
    $region23: #{tpu_custom_call.1} parent=5 // pred_region
      // Predicated region
      $region25: #{tpu_custom_call.1} parent=23 // pred_check
        %p156 = pneg %p31
      $region26: #{tpu_custom_call.1} parent=23 // pred_check_branch
        %158 = sbr.rel (%p156) target = $region28
      $region27: #{tpu_custom_call.1} parent=23 // pred_region
        %p159 = scmp.lt.s32.totalorder %s11, 1
        %s160 = scalar_select %p159, %s11, 1
        %s161 = smul.addr %s160, 8
        %s162 = scalar_lea.vmem %s0, %s161
      $region28: #{tpu_custom_call.1} parent=23 // pred_fallthru
        _
    $region24: #{tpu_custom_call.1} parent=5 // pred_fallthru
      _
    %p163 = scmp.le.s32.totalorder 1, %s11
    %p164 = scmp.lt.s32.totalorder %s11, 3
    %p165 = pnand %p163, %p164
    %p166 = pneg %p165
    // Predicated region
    $region29: #{tpu_custom_call.1} parent=5 // pred_check
      _
    $region30: #{tpu_custom_call.1} parent=5 // pred_check_branch
      %168 = sbr.rel (%p165) target = $region32
    $region31: #{tpu_custom_call.1} parent=5 // pred_region
      %s169 = ssub.s32 %s11, 1
      %p170 = scmp.lt.s32.totalorder %s16, 1
      %s171 = scalar_select %p170, %s16, 1
      %s172 = smul.addr %s171, 8
      %s173 = scalar_lea.vmem %s0, %s172
      %p174 = pneg %p37
      %p175 = pneg %p34
      %p176 = pneg %p58
      %p177 = pneg %p55
      %p178 = pneg %p79
      %p179 = pneg %p76
      %p180 = pneg %p105
      %p181 = pneg %p102
      %p182 = scmp.lt.s32.totalorder %s16, 1
      %s183 = scalar_select %p182, %s16, 1
      %s184 = smul.addr %s183, 8
      %s185 = scalar_lea.vmem %s3, %s184
      %p186 = pneg %p131
      %p187 = pneg %p128
      %p188 = scmp.lt.s32.totalorder %s16, 1
      %s189 = scalar_select %p188, %s16, 1
      %s190 = smul.addr %s189, 8
      %s191 = scalar_lea.vmem %s4, %s190
      %p192 = scmp.lt.s32.totalorder %s16, 1
      %s193 = scalar_select %p192, %s16, 1
      %s194 = smul.addr %s193, 8
      %s195 = scalar_lea.vmem %s0, %s194
      %p196 = scmp.lt.s32.totalorder %s16, 1
      %s197 = scalar_select %p196, %s16, 1
      %s198 = smul.addr %s197, 8
      %s199 = scalar_lea.vmem %s3, %s198
      %p200 = scmp.lt.s32.totalorder %s16, 1
      %s201 = scalar_select %p200, %s16, 1
      %s202 = smul.addr %s201, 8
      %s203 = scalar_lea.vmem %s4, %s202
      %v204 = vld [vmem:[%s195] sm:$0xff]
      %v205 = vld [vmem:[%s1] sm:$0xff]
      %v206 = vld [vmem:[%s1 + $0x8] sm:$0xff]
      %v207 = vld [vmem:[%s1 + $0x10] sm:$0xff]
      %v208 = vld [vmem:[%s1 + $0x18] sm:$0xff]
      %v209 = vld [vmem:[%s2] sm:$0x1]
      %v211 = vlaneseq
      %v212 = vshrl.u32 %v211, 7
      %v213 = vsub.s32 0, %v212
      %v214 = vrot.slane %v209, %v213
      %vm216 = vcmask 261120
      %v218 = vsel %vm216, %v204, 0
      %220 = vmatprep.subr.mxu0 0.0
      %221 = vmatpush1.msra.mxu0 %v205
      %222 = vmatprep.subr.mxu0 0.0
      %223 = vmatpush1.msra.mxu0 %v206
      %224 = vmatprep.subr.mxu0 0.0
      %225 = vmatpush1.msra.mxu0 %v207
      %226 = vmatprep.subr.mxu0 0.0
      %227 = vmatpush1.msra.mxu0 %v208
      %228 = vmatprep.subr.mxu0 0.0
      %229 = vmatpush1.msra.mxu0 0.0
      %230 = vmatprep.subr.mxu0 0.0
      %231 = vmatpush1.msra.mxu0 0.0
      %232 = vmatprep.subr.mxu0 0.0
      %233 = vmatpush1.msra.mxu0 0.0
      %234 = vmatprep.subr.mxu0 0.0
      %235 = vmatpush1.msra.mxu0 0.0
      %236 = vmatprep.subr.mxu0 0.0
      %237 = vmatpush1.msra.mxu0 0.0
      %238 = vmatprep.subr.mxu0 0.0
      %239 = vmatpush1.msra.mxu0 0.0
      %240 = vmatprep.subr.mxu0 0.0
      %241 = vmatpush1.msra.mxu0 0.0
      %242 = vmatprep.subr.mxu0 0.0
      %243 = vmatpush1.msra.mxu0 0.0
      %244 = vmatprep.subr.mxu0 0.0
      %245 = vmatpush1.msra.mxu0 0.0
      %246 = vmatprep.subr.mxu0 0.0
      %247 = vmatpush1.msra.mxu0 0.0
      %248 = vmatprep.subr.mxu0 0.0
      %249 = vmatpush1.msra.mxu0 0.0
      %250 = vmatprep.subr.mxu0 0.0
      %251 = vmatpush1.msra.mxu0 0.0
      %252 = vmatprep.subr.mxu0 0.0
      %253 = vmatpush1.msra.mxu0 0.0
      %254 = vmatprep.subr.mxu0 0.0
      %255 = vmatpush1.msra.mxu0 0.0
      %256 = vmatprep.subr.mxu0 0.0
      %257 = vmatpush1.msra.mxu0 0.0
      %258 = vmatprep.subr.mxu0 0.0
      %259 = vmatpush1.msra.mxu0 0.0
      %260 = vmatprep.subr.mxu0 0.0
      %261 = vmatpush1.msra.mxu0 0.0
      %262 = vmatprep.subr.mxu0 0.0
      %263 = vmatpush1.msra.mxu0 0.0
      %264 = vmatprep.subr.mxu0 0.0
      %265 = vmatpush1.msra.mxu0 0.0
      %266 = vmatprep.subr.mxu0 0.0
      %267 = vmatpush1.msra.mxu0 0.0
      %268 = vmatprep.subr.mxu0 0.0
      %269 = vmatpush1.msra.mxu0 0.0
      %270 = vmatprep.subr.mxu0 0.0
      %271 = vmatpush1.msra.mxu0 0.0
      %272 = vmatprep.subr.mxu0 0.0
      %273 = vmatpush1.msra.mxu0 0.0
      %274 = vmatprep.subr.mxu0 0.0
      %275 = vmatpush1.msra.mxu0 0.0
      %276 = vmatprep.subr.mxu0 0.0
      %277 = vmatpush1.msra.mxu0 0.0
      %278 = vmatprep.subr.mxu0 0.0
      %279 = vmatpush1.msra.mxu0 0.0
      %280 = vmatprep.subr.mxu0 0.0
      %281 = vmatpush1.msra.mxu0 0.0
      %282 = vmatprep.subr.mxu0 0.0
      %283 = vmatpush1.msra.mxu0 0.0
      %284 = vmatprep.mubr.f32.mxu0 0.0
      %285 = vmatmul.mubr.f32.gmra.mrb[0].mxu0 %v218
      %v286 = vpop.f32.mrb[0].mxu0
      %v287 = vadd.f32 %v214, %v286
      %v288 = vpop.f32.mrb[0].mxu0
      %289 = vdwg.mxu0
      %vm290 = vcmask 64512
      %v291 = vsel %vm290, %v287, -inf
      %292 = vmax.xlane.f32.xlu0 %v291
      %v293 = vpop.xlane.xlu0 %292
      %v294 = vsub.f32 %v287, %v293
      %v295 = vmul.f32 %v294, 1.442695
      %v296 = vpow.pop %v295
      %v297 = vsel %vm290, %v296, 0.0
      %298 = vadd.xlane.f32.xlu0 %v297
      %v299 = vpop.xlane.xlu0 %298
      %v300 = vrcp.pop %v299
      %v301 = vmul.f32 %v299, %v300
      %v302 = vsub.f32 2.0, %v301
      %v303 = vmul.f32 %v300, %v302
      %v304 = vmul.f32 %v296, %v303
      %305 = vst.msk [vmem:[%s199] sm:$0xff] %vm290, %v304
      %v306 = vlaneseq
      %v307 = vand.u32 %v306, 127
      %vm308 = vcmp.eq.f32.partialorder %v287, %v293
      %v309 = vsel %vm308, %v307, 8
      %v310 = vsel %vm290, %v309, 2147483647
      %v311 = vand.u32 %v310, 65535
      %v312 = vshra.s32 %v310, 16
      %v313 = vcvt.s32.f32 %v311
      %v314 = vcvt.s32.f32 %v312
      %315 = vmin.xlane.f32.xlu0 %v314
      %v316 = vpop.xlane.xlu0 %315
      %vm317 = vcmp.eq.f32.partialorder %v314, %v316
      %v318 = vsel %vm317, %v313, inf
      %319 = vmin.xlane.f32.xlu0 %v318
      %v320 = vpop.xlane.xlu0 %319
      %v321 = vcvt.f32.s32 %v320
      %v322 = vcvt.f32.s32 %v316
      %v323 = vshll.u32 %v322, 16
      %v324 = vadd.s32 %v323, %v321
      %vm325 = vcmask 7168
      %326 = vst.msk [vmem:[%s203] sm:$0xff] %vm325, %v324
      %p327 = scmp.lt.s32.totalorder %s16, 1
      %s328 = scalar_select %p327, %s16, 1
      %s329 = smul.addr %s328, 8
      %s330 = scalar_lea.vmem %s3, %s329
      %p331 = scmp.lt.s32.totalorder %s16, 1
      %s332 = scalar_select %p331, %s16, 1
      %s333 = smul.addr %s332, 8
      %s334 = scalar_lea.vmem %s4, %s333
      // Predicated region
      $region33: #{tpu_custom_call.1} parent=31 // pred_check
        %p335 = pneg %p102
      $region34: #{tpu_custom_call.1} parent=31 // pred_check_branch
        %337 = sbr.rel (%p335) target = $region36
      $region35: #{tpu_custom_call.1} parent=31 // pred_region
        _
      $region36: #{tpu_custom_call.1} parent=31 // pred_fallthru
        _
      // Predicated region
      $region37: #{tpu_custom_call.1} parent=31 // pred_check
        %p338 = pneg %p128
      $region38: #{tpu_custom_call.1} parent=31 // pred_check_branch
        %340 = sbr.rel (%p338) target = $region40
      $region39: #{tpu_custom_call.1} parent=31 // pred_region
        _
      $region40: #{tpu_custom_call.1} parent=31 // pred_fallthru
        _
    $region32: #{tpu_custom_call.1} parent=5 // pred_fallthru
      _
    %p341 = scmp.le.s32.totalorder 2, %s11
    // Predicated region
    $region41: #{tpu_custom_call.1} parent=5 // pred_check
      %p342 = pneg %p341
    $region42: #{tpu_custom_call.1} parent=5 // pred_check_branch
      %344 = sbr.rel (%p342) target = $region44
    $region43: #{tpu_custom_call.1} parent=5 // pred_region
      %s345 = ssub.s32 %s11, 2
      // Predicated region
      $region45: #{tpu_custom_call.1} parent=43 // pred_check
        %p346 = pneg %p108
      $region46: #{tpu_custom_call.1} parent=43 // pred_check_branch
        %348 = sbr.rel (%p346) target = $region48
      $region47: #{tpu_custom_call.1} parent=43 // pred_region
        %p349 = scmp.lt.s32.totalorder %s17, 1
        %s350 = scalar_select %p349, %s17, 1
        %s351 = smul.addr %s350, 8
        %s352 = scalar_lea.vmem %s3, %s351
      $region48: #{tpu_custom_call.1} parent=43 // pred_fallthru
        _
      // Predicated region
      $region49: #{tpu_custom_call.1} parent=43 // pred_check
        %p353 = pneg %p134
      $region50: #{tpu_custom_call.1} parent=43 // pred_check_branch
        %355 = sbr.rel (%p353) target = $region52
      $region51: #{tpu_custom_call.1} parent=43 // pred_region
        %p356 = scmp.lt.s32.totalorder %s17, 1
        %s357 = scalar_select %p356, %s17, 1
        %s358 = smul.addr %s357, 8
        %s359 = scalar_lea.vmem %s4, %s358
      $region52: #{tpu_custom_call.1} parent=43 // pred_fallthru
        _
    $region44: #{tpu_custom_call.1} parent=5 // pred_fallthru
      _
  $region6: #{tpu_custom_call.1} parent=0 // loop_footer
    %s15 = sadd.s32 1, %s11
  $region7: #{tpu_custom_call.1} parent=0 // loop_footer_branch
    %10 = sbr.rel target = $region3
  $region8: #{tpu_custom_call.1} parent=0 // loop_exit
    _

</llo_original>
